<compile_context>
chip_gen: v5e
topology: v5e:2x2
jax: 0.10.0
libtpu: 0.0.40
codegen_flags: <defaults>
</compile_context>

<pallas_src>
import functools

import jax
import jax.numpy as jnp
from jax.experimental import pallas as pl
from jax.experimental.pallas import tpu as pltpu

LANES = 128
SUBLANES = 8
TARGET_TILE_BYTES = 4 << 20   # ~4 MiB input tiles for the streaming passes


def _vmem_capacity_bytes():
    """Physical VMEM capacity; conservative (v7x) fallback if query fails."""
    try:
        info = pltpu.get_tpu_info()
        cap = int(getattr(info, "vmem_capacity_bytes", 64 << 20))
        if cap > 0:
            return cap
    except Exception:
        pass
    return 64 << 20


def _fused_kernel(x_ref, o_ref, *, new_min, new_max):
    """Single-pass path: whole (rows, 128) slab resident in VMEM."""
    x = x_ref[...]
    mn = jnp.min(x).astype(jnp.float32)        # reduce in native dtype
    mx = jnp.max(x).astype(jnp.float32)
    # Hoisted divide: y = x * scale + bias (inf/nan when mx == mn, torch parity)
    scale = (new_min - new_max) / (mx - mn)
    bias = new_max - mn * scale
    o_ref[...] = (x.astype(jnp.float32) * scale + bias).astype(o_ref.dtype)


def _partial_minmax_kernel(x_ref, o_ref, *, rows, block_rows, needs_mask):
    """Pass 1: per-block (8, 256) packed partial [min | max], native-dtype reduce."""
    x = x_ref[...]
    if needs_mask:
        i = pl.program_id(0)
        valid = rows - i * block_rows            # rows of this block holding real data
        row_ids = jax.lax.broadcasted_iota(jnp.int32, x.shape, 0)
        in_range = row_ids < valid
        if jnp.issubdtype(x.dtype, jnp.floating):
            min_fill = jnp.array(jnp.inf, dtype=x.dtype)
            max_fill = jnp.array(-jnp.inf, dtype=x.dtype)
        else:
            min_fill = jnp.array(jnp.iinfo(x.dtype).max, dtype=x.dtype)
            max_fill = jnp.array(jnp.iinfo(x.dtype).min, dtype=x.dtype)
        x_for_min = jnp.where(in_range, x, min_fill)
        x_for_max = jnp.where(in_range, x, max_fill)
    else:
        x_for_min = x
        x_for_max = x
    pmin = jnp.min(x_for_min.reshape(-1, SUBLANES, LANES), axis=0)
    pmax = jnp.max(x_for_max.reshape(-1, SUBLANES, LANES), axis=0)
    o_ref[:, :LANES] = pmin.astype(jnp.float32)
    o_ref[:, LANES:] = pmax.astype(jnp.float32)


def _apply_kernel(sb_ref, x_ref, o_ref):
    """Pass 2: y = x * scale + bias; [scale, bias] held in SMEM."""
    scale = sb_ref[0]
    bias = sb_ref[1]
    o_ref[...] = (x_ref[...].astype(jnp.float32) * scale + bias).astype(o_ref.dtype)


def normalize(x, new_min=0.0, new_max=1.0, *, force_two_pass=False):
    orig_shape = x.shape
    orig_dtype = x.dtype
    total = x.size
    itemsize = jnp.dtype(orig_dtype).itemsize

    vmem_cap = _vmem_capacity_bytes()
    # Cap, not a reservation: compiler only uses what the kernel needs.
    vmem_limit = min(int(vmem_cap * 0.70), 96 << 20)

    # Only pad to a 128-lane boundary (needed to view the data as (rows, 128));
    # common shapes (multiples of 128 elements) take the zero-copy path.
    flat = x.reshape(-1)
    pad = (-total) % LANES
    if pad:
        flat = jnp.pad(flat, (0, pad), mode="edge")   # repeats a real element
    rows = (total + pad) // LANES
    x2 = flat.reshape(rows, LANES)

    # Fused-path estimate: native in + out buffers plus ~3x f32 temporaries.
    fused_vmem_est = 2 * total * itemsize + 3 * total * 4
    use_fused = (not force_two_pass) and (fused_vmem_est <= vmem_limit - (8 << 20))

    if use_fused:
        out = pl.pallas_call(
            functools.partial(_fused_kernel,
                              new_min=float(new_min), new_max=float(new_max)),
            out_shape=jax.ShapeDtypeStruct((rows, LANES), orig_dtype),
            compiler_params=pltpu.CompilerParams(vmem_limit_bytes=vmem_limit),
        )(x2)
    else:
        # ~4 MiB lane-dense tiles; cap so grid_n >= 2 (v7x megacore sharding).
        tile_rows = max(SUBLANES, TARGET_TILE_BYTES // (LANES * itemsize))
        tile_rows = (tile_rows // SUBLANES) * SUBLANES
        half_rows = pl.cdiv(pl.cdiv(rows, 2), SUBLANES) * SUBLANES
        block_rows = max(SUBLANES, min(tile_rows, half_rows))
        grid_n = pl.cdiv(rows, block_rows)
        needs_mask = (rows % block_rows) != 0

        # Pass 1: parallel per-block partial min/max, packed [min | max] output.
        pminmax = pl.pallas_call(
            functools.partial(_partial_minmax_kernel,
                              rows=rows, block_rows=block_rows,
                              needs_mask=needs_mask),
            out_shape=jax.ShapeDtypeStruct((grid_n * SUBLANES, 2 * LANES),
                                           jnp.float32),
            grid=(grid_n,),
            in_specs=[pl.BlockSpec((block_rows, LANES), lambda i: (i, 0))],
            out_specs=pl.BlockSpec((SUBLANES, 2 * LANES), lambda i: (i, 0)),
            compiler_params=pltpu.CompilerParams(
                dimension_semantics=("parallel",),
                vmem_limit_bytes=vmem_limit),
        )(x2)

        # Tiny final reduce + one-time scale/bias fold (scalar XLA ops).
        mn = jnp.min(pminmax[:, :LANES])
        mx = jnp.max(pminmax[:, LANES:])
        delta = jnp.float32(new_min) - jnp.float32(new_max)
        scale = delta / (mx - mn)                  # inf/nan if mx == mn (torch parity)
        bias = jnp.float32(new_max) - mn * scale
        scale_bias = jnp.stack([scale, bias]).astype(jnp.float32)

        # Pass 2: streamed multiply-add; boundary writes clipped by Pallas.
        out = pl.pallas_call(
            _apply_kernel,
            out_shape=jax.ShapeDtypeStruct((rows, LANES), orig_dtype),
            grid=(grid_n,),
            in_specs=[
                pl.BlockSpec(memory_space=pltpu.SMEM),
                pl.BlockSpec((block_rows, LANES), lambda i: (i, 0)),
            ],
            out_specs=pl.BlockSpec((block_rows, LANES), lambda i: (i, 0)),
            compiler_params=pltpu.CompilerParams(
                dimension_semantics=("parallel",),
                vmem_limit_bytes=vmem_limit),
        )(scale_bias, x2)

    out_flat = out.reshape(-1)
    if pad:
        out_flat = out_flat[:total]
    return out_flat.reshape(orig_shape)


if __name__ == "__main__":
    key = jax.random.PRNGKey(0)
    new_min, new_max = 0.0, 1.0

    def ref_normalize(a):
        an = (a - a.min()) / (a.max() - a.min())
        return an * (new_min - new_max) + new_max

    # Small NCHW input: batch=2, channels=4, spatial=16x16 (fused path).
    x = jax.random.normal(key, (2, 4, 16, 16), dtype=jnp.float32)
    y_ref = ref_normalize(x)
    y = jax.block_until_ready(normalize(x, new_min, new_max))
    assert y.shape == x.shape and y.dtype == x.dtype
    assert jnp.allclose(y, y_ref, atol=1e-5, rtol=1e-5)

    # Same data through the tiled two-pass (large-input) path.
    y2 = jax.block_until_ready(normalize(x, new_min, new_max, force_two_pass=True))
    assert y2.shape == x.shape and y2.dtype == x.dtype
    assert jnp.allclose(y2, y_ref, atol=1e-5, rtol=1e-5)

    # Ragged shape: exercises lane padding + in-kernel tail-row masking.
    xr = jax.random.normal(jax.random.PRNGKey(1), (3, 5, 7, 11), dtype=jnp.float32)
    yr_ref = ref_normalize(xr)
    yr = jax.block_until_ready(normalize(xr, new_min, new_max, force_two_pass=True))
    assert yr.shape == xr.shape and yr.dtype == xr.dtype
    assert jnp.allclose(yr, yr_ref, atol=1e-5, rtol=1e-5)

    print("KERNEL_OK")
</pallas_src>

<mosaic_0001>
module attributes {stable_mosaic.version = 11 : i64} {
  func.func @_fused_kernel(%arg0: memref<16x128xf32, #tpu.memory_space<vmem>>, %arg1: memref<16x128xf32, #tpu.memory_space<vmem>>) attributes {dimension_semantics = [], scalar_prefetch = 0 : i64, scratch_operands = 0 : i64, tpu.core_type = #tpu.core_type<tc>} {
    %c0 = arith.constant 0 : index
    %c0_0 = arith.constant 0 : index
    %0 = vector.load %arg0[%c0, %c0_0] : memref<16x128xf32, #tpu.memory_space<vmem>>, vector<16x128xf32>
    %1 = vector.shape_cast %0 : vector<16x128xf32> to vector<1x16x128xf32>
    %cst = arith.constant dense<0x7F800000> : vector<1xf32>
    %2 = vector.multi_reduction <minimumf>, %1, %cst [1, 2] : vector<1x16x128xf32> to vector<1xf32>
    %3 = vector.shape_cast %2 : vector<1xf32> to vector<1x1x1xf32>
    %4 = vector.extract %3[0, 0, 0] : f32 from vector<1x1x1xf32>
    %5 = vector.shape_cast %0 : vector<16x128xf32> to vector<1x16x128xf32>
    %cst_1 = arith.constant dense<0xFF800000> : vector<1xf32>
    %6 = vector.multi_reduction <maximumf>, %5, %cst_1 [1, 2] : vector<1x16x128xf32> to vector<1xf32>
    %7 = vector.shape_cast %6 : vector<1xf32> to vector<1x1x1xf32>
    %8 = vector.extract %7[0, 0, 0] : f32 from vector<1x1x1xf32>
    %9 = arith.subf %8, %4 : f32
    %cst_2 = arith.constant -1.000000e+00 : f32
    %10 = arith.divf %cst_2, %9 : f32
    %11 = arith.mulf %4, %10 : f32
    %cst_3 = arith.constant 1.000000e+00 : f32
    %12 = arith.subf %cst_3, %11 : f32
    %13 = vector.broadcast %10 : f32 to vector<16x128xf32>
    %14 = arith.mulf %0, %13 : vector<16x128xf32>
    %15 = vector.broadcast %12 : f32 to vector<16x128xf32>
    %16 = arith.addf %14, %15 : vector<16x128xf32>
    %c0_4 = arith.constant 0 : index
    %c0_5 = arith.constant 0 : index
    %17 = vector.load %arg1[%c0_4, %c0_5] : memref<16x128xf32, #tpu.memory_space<vmem>>, vector<16x128xf32>
    tpu.vector_store %arg1[%c0_4, %c0_5], %16 {strides = array<i32>} : memref<16x128xf32, #tpu.memory_space<vmem>>, vector<16x128xf32>,
    return
  }
}

</mosaic_0001>

<llo_original>
// kernel: tpu_custom_call.1
$region0: #{tpu_custom_call.1}
  #allocation0 [shape = 'u32[]', space=smem, size = 0x4, offset = 0x4, fixed_abs, tag = 'smem constant byte address 0x4 - core index']
  #allocation1 [shape = 'u32[72,128]{1,0:T(1,128)}', space=vmem, size = 0x9000, scoped, tag = 'internal scratch']
  %s0 = inlined_call_operand.hbm [shape: f32[16,128], index: 0, kind: input, shape index: {}]
  %s1 = inlined_call_operand.hbm [shape: f32[16,128], index: 1, kind: output, shape index: {}]
  %s2 = sld [smem:[#allocation0]]
  $region18: #{tpu_custom_call.1} parent=0
    _
  %s4 = ssub.s32 1, %s2
  %s5 = scalar_select 0, %s4, %s2
  $region1: #{tpu_custom_call.1} parent=0
    #allocation2 [shape = 'u8[8192]{0}', space=vmem, size = 0x2000, scoped, tag = 'input window, operand 0, single buffered']
    #allocation3 [shape = 's32[1]{0}', space=sflag, size = 0x4, scoped, tag = 'scoped memory for tpu_custom_call.1']
    #allocation4 [shape = 's32[1]{0}', space=sflag, size = 0x4, scoped, tag = 'scoped memory for tpu_custom_call.1']
    #allocation5 [shape = 'u8[8192]{0}', space=vmem, size = 0x2000, scoped, tag = 'output window, operand 0, single buffered']
    %6 = vsyncpa [#allocation3], 0
    %7 = vsyncpa [#allocation4], 0
    // Predicated region
    $region2: #{tpu_custom_call.1} parent=1 // pred_check
      _
    $region3: #{tpu_custom_call.1} parent=1 // pred_check_branch
      %9 = sbr.rel (0) target = $region5
    $region4: #{tpu_custom_call.1} parent=1 // pred_region
      %11 = vsyncadd [#allocation3], 0
      %s12 = sshll.u32 %s0, 4
      %s13 = int_to_ptr.hbm [resolvable:$true] %s12
      %s14 = sshll.u32 [#allocation2], 4
      %s15 = int_to_ptr.vmem [resolvable:$true] %s14
      %20 = dma.hbm_to_vmem [thread:$0]  %s13, 256, %s15, [#allocation3], 128, 128, 8
    $region5: #{tpu_custom_call.1} parent=1 // pred_fallthru
      _
    // Predicated region
    $region6: #{tpu_custom_call.1} parent=1 // pred_check
      _
    $region7: #{tpu_custom_call.1} parent=1 // pred_check_branch
      %22 = sbr.rel (0) target = $region9
    $region8: #{tpu_custom_call.1} parent=1 // pred_region
      %24 = dma.done [#allocation3], 256
    $region9: #{tpu_custom_call.1} parent=1 // pred_fallthru
      _
    %v25 = vld [vmem:[#allocation2] sm:$0xff]
    %v26 = vld [vmem:[#allocation2 + $0x8] sm:$0xff]
    %v27 = vmin.f32 %v25, %v26
    %28 = vmin.xlane.f32.xlu0 %v27
    %v29 = vpop.xlane.xlu0 %28
    %v30 = vrot.slane %v29, 4
    %v31 = vmin.f32 %v29, %v30
    %v32 = vrot.slane %v31, 2
    %v33 = vmin.f32 %v31, %v32
    %v34 = vrot.slane %v33, 1
    %v35 = vmin.f32 %v33, %v34
    %s36 = vtos %v35
    %v37 = vmax.f32 %v25, %v26
    %38 = vmax.xlane.f32.xlu0 %v37
    %v39 = vpop.xlane.xlu0 %38
    %v40 = vrot.slane %v39, 4
    %v41 = vmax.f32 %v39, %v40
    %v42 = vrot.slane %v41, 2
    %v43 = vmax.f32 %v41, %v42
    %v44 = vrot.slane %v43, 1
    %v45 = vmax.f32 %v43, %v44
    %s46 = vtos %v45
    %s47 = ssub.f32 %s46, %s36
    %v48 = vstv %s47
    %v49 = vrcp.pop %v48
    %v50 = vmul.f32 %v48, %v49
    %v51 = vsub.f32 1.0, %v50
    %v52 = vmul.f32 %v49, %v51
    %v53 = vadd.f32 %v49, %v52
    %vm54 = vweird.f32 %v48
    %vm55 = vweird.f32 %v49
    %vm56 = vmor %vm54, %vm55
    %v57 = vsel %vm56, %v49, %v53
    %v58 = vand.u32 2147483647, %v48
    %vm59 = vcmp.eq.f32.partialorder %v58, 8.507059e+37
    %v60 = vand.u32 %v48, 2147483648
    %v61 = vor.u32 1.1754944e-38, %v60
    %v62 = vsel %vm59, %v61, %v57
    %s63 = vtos %v62
    %s64 = smul.f32 -1.0, %s63
    %s65 = smul.f32 %s36, %s64
    %s66 = ssub.f32 1.0, %s65
    %v67 = vstv %s64
    %v68 = vmul.f32 %v25, %v67
    %v69 = vmul.f32 %v26, %v67
    %v70 = vstv %s66
    %v71 = vadd.f32 %v68, %v70
    %v72 = vadd.f32 %v69, %v70
    %73 = vst [vmem:[#allocation5] sm:$0xff] %v71
    %74 = vst [vmem:[#allocation5 + $0x8] sm:$0xff] %v72
    // Predicated region
    $region10: #{tpu_custom_call.1} parent=1 // pred_check
      _
    $region11: #{tpu_custom_call.1} parent=1 // pred_check_branch
      %76 = sbr.rel (0) target = $region13
    $region12: #{tpu_custom_call.1} parent=1 // pred_region
      %78 = vsyncadd [#allocation4], 0
      %s79 = sshll.u32 [#allocation5], 4
      %s80 = int_to_ptr.vmem [resolvable:$true] %s79
      %s81 = sshll.u32 %s1, 4
      %s82 = int_to_ptr.hbm [resolvable:$true] %s81
      %87 = dma.vmem_to_hbm [thread:$0]  %s80, 256, %s82, [#allocation4], 128, 128, 8
    $region13: #{tpu_custom_call.1} parent=1 // pred_fallthru
      _
    // Predicated region
    $region14: #{tpu_custom_call.1} parent=1 // pred_check
      _
    $region15: #{tpu_custom_call.1} parent=1 // pred_check_branch
      %89 = sbr.rel (0) target = $region17
    $region16: #{tpu_custom_call.1} parent=1 // pred_region
      %91 = dma.done [#allocation4], 256
    $region17: #{tpu_custom_call.1} parent=1 // pred_fallthru
      _
    %92 = vsyncpa [#allocation3], 1
    %93 = vsyncpa [#allocation4], 1

</llo_original>
